<compile_context>
chip_gen: v7x
topology: tpu7x:2x2x1
jax: 0.10.0
libtpu: 0.0.40
codegen_flags: <defaults>
</compile_context>

<pallas_src>
import jax
import jax.numpy as jnp
from jax.experimental import pallas as pl
from jax.experimental.pallas import tpu as pltpu


def _replicate_kernel(pat_ref, out_ref):
    """Replicate one channel-block of the positional pattern over a batch block.

    pat_ref: (CF, H*W)      lane-dense channel-major pattern slice
    out_ref: (BT, CF, H*W)  output block (BT batch elements x CF channels)
    """
    out_ref[...] = jnp.broadcast_to(pat_ref[...][None, :, :], out_ref.shape)


def _divisors(n):
    return [d for d in range(1, n + 1) if n % d == 0]


def position_embedding_learned(x, mask, col_weight, row_weight):
    """Pallas-backed forward of PositionEmbeddingLearned.

    x:          (B, C, H, W)  -- only the shape is used (as in PyTorch)
    mask:       unused (kept for signature parity with the torch module)
    col_weight: (size, F)  col_embed.weight
    row_weight: (size, F)  row_embed.weight
    returns:    (B, 2F, H, W), matching the PyTorch output exactly.
    """
    del mask
    b = x.shape[0]
    h, w = x.shape[-2], x.shape[-1]
    size, f = col_weight.shape
    assert row_weight.shape == (size, f)
    assert h <= size and w <= size

    out_dtype = col_weight.dtype
    itemsize = jnp.dtype(out_dtype).itemsize
    two_f = 2 * f
    hw = h * w

    # ---- Wrapper-side: build the lane-dense channel-major pattern once. ----
    # pattern[c, hh*W + ww] = col_weight[ww, c]        for c <  F
    # pattern[c, hh*W + ww] = row_weight[hh, c - F]    for c >= F
    col_t = jnp.transpose(col_weight[:w, :], (1, 0))              # (F, W)
    row_t = jnp.transpose(row_weight[:h, :], (1, 0))              # (F, H)
    x_part = jnp.broadcast_to(col_t[:, None, :], (f, h, w))       # (F, H, W)
    y_part = jnp.broadcast_to(row_t[:, :, None], (f, h, w))       # (F, H, W)
    pattern = jnp.concatenate([x_part, y_part], axis=0).reshape(two_f, hw)

    # ---- Channel block: divisor of 2F, multiple of 8 (sublane rule), buffer
    # <= ~1 MiB, and >= 2 channel blocks when possible (v7x megacore balance).
    ch_budget = 1 * 1024 * 1024
    ch_cands = [d for d in _divisors(two_f) if d % 8 == 0] or [two_f]
    fitting = [d for d in ch_cands
               if d * hw * itemsize <= ch_budget and two_f // d >= 2]
    if fitting:
        cf = max(fitting)
    else:
        small = [d for d in ch_cands if d * hw * itemsize <= ch_budget]
        cf = max(small) if small else min(ch_cands)
    ncb = two_f // cf

    # ---- Batch block: pack batch elements per step (per-step overhead ~0.35us)
    # while keeping the output block <= ~4 MiB (double-buffered it stays well
    # under v5e's 16 MiB / v7x's 32 MiB default scoped VMEM).
    bt_budget = 4 * 1024 * 1024
    bt = 1
    for d in sorted(_divisors(b), reverse=True):
        if d * cf * hw * itemsize <= bt_budget:
            bt = d
            break
    if ncb * (b // bt) < 2 and b > 1:
        # Keep at least two grid steps so v7x's two TensorCores both get work.
        bt = max(d for d in _divisors(b) if d <= b // 2)
    nbb = b // bt

    out_bytes = b * two_f * hw * itemsize
    pattern_bytes = two_f * hw * itemsize   # fetched once (constant index map)

    pos_flat = pl.pallas_call(
        _replicate_kernel,
        out_shape=jax.ShapeDtypeStruct((b, two_f, hw), out_dtype),
        grid_spec=pltpu.PrefetchScalarGridSpec(
            num_scalar_prefetch=0,
            # Channel-block axis outer so the pattern block index is constant
            # across the inner batch loop -> pattern DMA'd once per channel blk.
            grid=(ncb, nbb),
            in_specs=[pl.BlockSpec((cf, hw), lambda j, i: (j, 0))],
            out_specs=pl.BlockSpec((bt, cf, hw), lambda j, i: (i, j, 0)),
        ),
        compiler_params=pltpu.CompilerParams(
            dimension_semantics=("parallel", "parallel"),
        ),
        cost_estimate=pl.CostEstimate(
            flops=0,
            transcendentals=0,
            bytes_accessed=out_bytes + pattern_bytes,
        ),
    )(pattern)

    # Row-major contiguous: this reshape is a free metadata change, not a copy.
    return pos_flat.reshape(b, two_f, h, w)


def _reference(x, col_weight, row_weight):
    """Pure-JAX reference mirroring the PyTorch forward exactly."""
    b = x.shape[0]
    h, w = x.shape[-2], x.shape[-1]
    x_emb = col_weight[jnp.arange(w)]                      # (W, F)
    y_emb = row_weight[jnp.arange(h)]                      # (H, F)
    pos = jnp.concatenate(
        [
            jnp.tile(x_emb[None, :, :], (h, 1, 1)),        # (H, W, F)
            jnp.tile(y_emb[:, None, :], (1, w, 1)),        # (H, W, F)
        ],
        axis=-1,
    )                                                      # (H, W, 2F)
    pos = jnp.transpose(pos, (2, 0, 1))[None]              # (1, 2F, H, W)
    return jnp.tile(pos, (b, 1, 1, 1))                     # (B, 2F, H, W)


if __name__ == "__main__":
    # Small, deterministic setup (module defaults are size=64, num_pos_feats=256;
    # scaled down here for a quick synthetic run).
    size = 16
    num_pos_feats = 32
    B, C, H, W = 2, 4, 16, 16

    key = jax.random.PRNGKey(0)
    k_row, k_col, k_x = jax.random.split(key, 3)

    # nn.init.uniform_ -> U[0, 1)
    row_weight = jax.random.uniform(k_row, (size, num_pos_feats), jnp.float32)
    col_weight = jax.random.uniform(k_col, (size, num_pos_feats), jnp.float32)

    x = jax.random.normal(k_x, (B, C, H, W), jnp.float32)
    mask = jnp.zeros((B, H, W), jnp.bool_)   # unused, parity with torch forward

    out = position_embedding_learned(x, mask, col_weight, row_weight)
    out = jax.block_until_ready(out)

    ref = _reference(x, col_weight, row_weight)
    assert out.shape == (B, 2 * num_pos_feats, H, W), out.shape
    assert out.dtype == jnp.float32
    assert jnp.allclose(out, ref), "mismatch vs reference"

    print("KERNEL_OK")
</pallas_src>

<mosaic_0001>
module attributes {stable_mosaic.version = 11 : i64} {
  func.func @_replicate_kernel(%arg0: i32, %arg1: i32, %arg2: memref<32x256xf32, #tpu.memory_space<vmem>>, %arg3: memref<2x32x256xf32, #tpu.memory_space<vmem>>) attributes {dimension_semantics = [#tpu.dimension_semantics<parallel>, #tpu.dimension_semantics<parallel>], iteration_bounds = array<i64: 2, 1>, scalar_prefetch = 0 : i64, scratch_operands = 0 : i64, tpu.core_type = #tpu.core_type<tc>, window_params = [{transform_indices = @transform_0, window_bounds = array<i64: 32, 256>}, {transform_indices = @transform_1, window_bounds = array<i64: 2, 32, 256>}]} {
    %c0 = arith.constant 0 : index
    %c0_0 = arith.constant 0 : index
    %0 = vector.load %arg2[%c0, %c0_0] : memref<32x256xf32, #tpu.memory_space<vmem>>, vector<32x256xf32>
    %1 = vector.shape_cast %0 : vector<32x256xf32> to vector<1x32x256xf32>
    %2 = vector.shape_cast %1 : vector<1x32x256xf32> to vector<1x32x256xf32>
    %3 = vector.broadcast %2 : vector<1x32x256xf32> to vector<2x32x256xf32>
    %c0_1 = arith.constant 0 : index
    %c0_2 = arith.constant 0 : index
    %c0_3 = arith.constant 0 : index
    %4 = vector.load %arg3[%c0_1, %c0_2, %c0_3] : memref<2x32x256xf32, #tpu.memory_space<vmem>>, vector<2x32x256xf32>
    tpu.vector_store %arg3[%c0_1, %c0_2, %c0_3], %3 {strides = array<i32>} : memref<2x32x256xf32, #tpu.memory_space<vmem>>, vector<2x32x256xf32>,
    return
  }
  func.func @transform_0(%arg0: i32, %arg1: i32) -> (i32, i32) {
    %c0_i32 = arith.constant 0 : i32
    %c0_i32_0 = arith.constant 0 : i32
    return %arg0, %c0_i32 : i32, i32
  }
  func.func @transform_1(%arg0: i32, %arg1: i32) -> (i32, i32, i32) {
    %c0_i32 = arith.constant 0 : i32
    %c0_i32_0 = arith.constant 0 : i32
    return %arg1, %arg0, %c0_i32 : i32, i32, i32
  }
}

</mosaic_0001>

<llo_original>
// kernel: tpu_custom_call.1
$region0: #{tpu_custom_call.1}
  #allocation0 [shape = 'u32[]', space=smem, size = 0x4, offset = 0x4, fixed_abs, tag = 'smem constant byte address 0x4 - core index']
  #allocation1 [shape = 'u32[144,128]{1,0:T(1,128)}', space=vmem, size = 0x12000, scoped, tag = 'internal scratch']
  #allocation6 [shape = 's32[]', space=sflag, size = 0x4, offset = 0, fixed_abs, tag = 'sflag constant byte address 0x0 - dummy sync flag']
  %s0 = inlined_call_operand.hbm [shape: f32[64,256], index: 0, kind: input, shape index: {}]
  %s1 = inlined_call_operand.hbm [shape: f32[2,64,256], index: 1, kind: output, shape index: {}]
  %s2 = sld [smem:[#allocation0]]
  $region41: #{tpu_custom_call.1} parent=0
    _
  %s4 = ssub.s32 1, %s2
  %s5 = scalar_select 0, %s4, %s2
  $region1: #{tpu_custom_call.1} parent=0
    #allocation2 [shape = 'u8[65536]{0}', space=vmem, size = 0x10000, scoped, tag = 'input window, operand 0']
    #allocation3 [shape = 's32[2]{0}', space=sflag, size = 0x8, scoped, tag = 'scoped memory for tpu_custom_call.1']
    #allocation4 [shape = 's32[2]{0}', space=sflag, size = 0x8, scoped, tag = 'scoped memory for tpu_custom_call.1']
    #allocation5 [shape = 'u8[131072]{0}', space=vmem, size = 0x20000, scoped, tag = 'output window, operand 0']
    %6 = vsyncpa [#allocation3], 0
    %s7 = scalar_lea.sflag [#allocation3], 1
    %8 = vsyncpa %s7, 0
    %9 = vsyncpa [#allocation4], 0
    %s10 = scalar_lea.sflag [#allocation4], 1
    %11 = vsyncpa %s10, 0
    loop: start=0, step=1, limit=4
    $region2: #{tpu_custom_call.1} parent=1 // loop_pre_header
      _
    $region3: #{tpu_custom_call.1} parent=1 // loop_header
      %s13 = sphi 0, %s17
      %p14 = scmp.ge.s32.totalorder %s13, 4
      %s20 = sphi 0, %s32
      %s21 = sphi 0, %s28
      %s22 = sphi 0, %s20
      %s23 = sphi 0, %s21
      %s24 = sphi 0, %s22
      %s25 = sphi 0, %s23
      %s35 = sphi 0, %s37
      %s38 = sphi 0, %s35
      %s39 = sphi 0, %s38
      %s55 = sphi 0, %s39
      %s63 = sphi 0, %s65
      %s66 = sphi 0, %s63
      %s67 = sphi 0, %s66
      %s83 = sphi 0, %s67
    $region4: #{tpu_custom_call.1} parent=1 // loop_header_branch
      %16 = sbr.rel (%p14) target = $region8
    $region5: #{tpu_custom_call.1} parent=1 // loop_body
      %s18 = ssub.s32 %s13, 1
      %s19 = ssub.s32 %s13, 2
      %s26 = sadd.s32 1, %s21
      %p27 = scmp.ge.s32.totalorder %s26, 1
      %s28 = scalar_select %p27, 0, %s26
      %s29 = sadd.s32 1, %s20
      %s30 = scalar_select %p27, %s29, %s20
      %p31 = scmp.ge.s32.totalorder %s30, 2
      %s32 = scalar_select %p31, 0, %s30
      %s33 = ssub.s32 %s20, %s32
      %p34 = scmp.eq.s32.totalorder %s33, 0
      %s36 = sadd.s32 %s35, 1
      %s37 = scalar_select %p34, %s35, %s36
      %p40 = pneg %p34
      %p41 = scmp.eq.s32.totalorder %s13, 1
      %p42 = por %p40, %p41
      %p43 = scmp.ne.s32.totalorder %s35, %s38
      %p44 = scmp.eq.s32.totalorder %s13, 0
      %p45 = por %p43, %p44
      %p46 = scmp.ne.s32.totalorder %s35, %s38
      %p47 = scmp.eq.s32.totalorder %s18, 1
      %p48 = por %p46, %p47
      %p49 = scmp.ne.s32.totalorder %s38, %s39
      %p50 = scmp.eq.s32.totalorder %s18, 0
      %p51 = por %p49, %p50
      %p52 = scmp.ne.s32.totalorder %s38, %s39
      %p53 = scmp.eq.s32.totalorder %s19, 1
      %p54 = por %p52, %p53
      %p56 = scmp.ne.s32.totalorder %s39, %s55
      %p57 = scmp.eq.s32.totalorder %s19, 0
      %p58 = por %p56, %p57
      %s59 = ssub.s32 %s21, %s28
      %s60 = ssub.s32 %s20, %s32
      %s61 = sor.u32 %s59, %s60
      %p62 = scmp.eq.s32.totalorder %s61, 0
      %s64 = sadd.s32 %s63, 1
      %s65 = scalar_select %p62, %s63, %s64
      %p68 = pneg %p62
      %p69 = scmp.eq.s32.totalorder %s13, 1
      %p70 = por %p68, %p69
      %p71 = scmp.ne.s32.totalorder %s63, %s66
      %p72 = scmp.eq.s32.totalorder %s13, 0
      %p73 = por %p71, %p72
      %p74 = scmp.ne.s32.totalorder %s63, %s66
      %p75 = scmp.eq.s32.totalorder %s18, 1
      %p76 = por %p74, %p75
      %p77 = scmp.ne.s32.totalorder %s66, %s67
      %p78 = scmp.eq.s32.totalorder %s18, 0
      %p79 = por %p77, %p78
      %p80 = scmp.ne.s32.totalorder %s66, %s67
      %p81 = scmp.eq.s32.totalorder %s19, 1
      %p82 = por %p80, %p81
      %p84 = scmp.ne.s32.totalorder %s67, %s83
      %p85 = scmp.eq.s32.totalorder %s19, 0
      %p86 = por %p84, %p85
      %p87 = scmp.le.s32.totalorder 1, %s13
      %p88 = scmp.lt.s32.totalorder %s13, 3
      %p89 = pnand %p87, %p88
      %p90 = pneg %p89
      // Predicated region
      $region9: #{tpu_custom_call.1} parent=5 // pred_check
        _
      $region10: #{tpu_custom_call.1} parent=5 // pred_check_branch
        %92 = sbr.rel (%p89) target = $region12
      $region11: #{tpu_custom_call.1} parent=5 // pred_region
        %s93 = ssub.s32 %s13, 1
      $region12: #{tpu_custom_call.1} parent=5 // pred_fallthru
        _
      %p94 = scmp.lt.s32.totalorder %s13, 2
      // Predicated region
      $region13: #{tpu_custom_call.1} parent=5 // pred_check
        %p95 = pneg %p94
      $region14: #{tpu_custom_call.1} parent=5 // pred_check_branch
        %97 = sbr.rel (%p95) target = $region16
      $region15: #{tpu_custom_call.1} parent=5 // pred_region
        // Predicated region
        $region17: #{tpu_custom_call.1} parent=15 // pred_check
          %p98 = pneg %p45
        $region18: #{tpu_custom_call.1} parent=15 // pred_check_branch
          %100 = sbr.rel (%p98) target = $region20
        $region19: #{tpu_custom_call.1} parent=15 // pred_region
          %s101 = sand.u32 %s35, 1
          %s102 = scalar_lea.sflag [#allocation3], %s101
          %s103 = sand.u32 %s35, 1
          %s104 = smul.addr %s103, 64
          %s105 = scalar_lea.vmem [#allocation2], %s104
          %s106 = smul.u32 4, %s20
          %s108 = ssub.s32 1024, 1024
          %109 = vsyncadd %s102, %s108
          %s110 = smul.addr %s106, 2
          %s111 = smul.addr %s110, 128
          %s112 = scalar_lea.hbm %s0, %s111
          %s113 = sshll.u32 %s105, 4
          %s114 = int_to_ptr.vmem [resolvable:$true] %s113
          %119 = dma.hbm_to_vmem [thread:$0]  %s112, 1024, %s114, %s102, 256, 256, 16
        $region20: #{tpu_custom_call.1} parent=15 // pred_fallthru
          _
      $region16: #{tpu_custom_call.1} parent=5 // pred_fallthru
        _
      %p120 = scmp.le.s32.totalorder 1, %s13
      %p121 = scmp.lt.s32.totalorder %s13, 3
      %p122 = pnand %p120, %p121
      %p123 = pneg %p122
      // Predicated region
      $region21: #{tpu_custom_call.1} parent=5 // pred_check
        _
      $region22: #{tpu_custom_call.1} parent=5 // pred_check_branch
        %125 = sbr.rel (%p122) target = $region24
      $region23: #{tpu_custom_call.1} parent=5 // pred_region
        %s126 = ssub.s32 %s13, 1
        %s127 = sand.u32 %s38, 1
        %s128 = scalar_lea.sflag [#allocation3], %s127
        %s129 = sand.u32 %s38, 1
        %s130 = smul.addr %s129, 64
        %s131 = scalar_lea.vmem [#allocation2], %s130
        // Predicated region
        $region25: #{tpu_custom_call.1} parent=23 // pred_check
          %p132 = pneg %p51
        $region26: #{tpu_custom_call.1} parent=23 // pred_check_branch
          %134 = sbr.rel (%p132) target = $region28
        $region27: #{tpu_custom_call.1} parent=23 // pred_region
          %135 = dma.done %s128, 1024
        $region28: #{tpu_custom_call.1} parent=23 // pred_fallthru
          _
        %s136 = sand.u32 %s38, 1
        %s137 = scalar_lea.sflag [#allocation3], %s136
        %s138 = sand.u32 %s38, 1
        %s139 = smul.addr %s138, 64
        %s140 = scalar_lea.vmem [#allocation2], %s139
        %p141 = pneg %p51
        %p142 = pneg %p48
        %p143 = pneg %p79
        %p144 = pneg %p76
        %s145 = sand.u32 %s66, 1
        %s146 = scalar_lea.sflag [#allocation4], %s145
        %s147 = sand.u32 %s66, 1
        %s148 = smul.addr %s147, 128
        %s149 = scalar_lea.vmem [#allocation5], %s148
        %s150 = smul.u32 4, %s22
        %s151 = smul.u32 2, %s23
        %s152 = smul.u32 4, %s22
        %v153 = vld [vmem:[%s131] sm:$0xff]
        %v154 = vld [vmem:[%s131 + $0x8] sm:$0xff]
        %v155 = vld [vmem:[%s131 + $0x10] sm:$0xff]
        %v156 = vld [vmem:[%s131 + $0x18] sm:$0xff]
        %v157 = vld [vmem:[%s131 + $0x20] sm:$0xff]
        %v158 = vld [vmem:[%s131 + $0x28] sm:$0xff]
        %v159 = vld [vmem:[%s131 + $0x30] sm:$0xff]
        %v160 = vld [vmem:[%s131 + $0x38] sm:$0xff]
        %161 = vst [vmem:[%s149] sm:$0xff] %v153
        %162 = vst [vmem:[%s149 + $0x8] sm:$0xff] %v154
        %163 = vst [vmem:[%s149 + $0x10] sm:$0xff] %v155
        %164 = vst [vmem:[%s149 + $0x18] sm:$0xff] %v156
        %165 = vst [vmem:[%s149 + $0x20] sm:$0xff] %v157
        %166 = vst [vmem:[%s149 + $0x28] sm:$0xff] %v158
        %167 = vst [vmem:[%s149 + $0x30] sm:$0xff] %v159
        %168 = vst [vmem:[%s149 + $0x38] sm:$0xff] %v160
        %169 = vst [vmem:[%s149 + $0x40] sm:$0xff] %v153
        %170 = vst [vmem:[%s149 + $0x48] sm:$0xff] %v154
        %171 = vst [vmem:[%s149 + $0x50] sm:$0xff] %v155
        %172 = vst [vmem:[%s149 + $0x58] sm:$0xff] %v156
        %173 = vst [vmem:[%s149 + $0x60] sm:$0xff] %v157
        %174 = vst [vmem:[%s149 + $0x68] sm:$0xff] %v158
        %175 = vst [vmem:[%s149 + $0x70] sm:$0xff] %v159
        %176 = vst [vmem:[%s149 + $0x78] sm:$0xff] %v160
        %s177 = sand.u32 %s66, 1
        %s178 = scalar_lea.sflag [#allocation4], %s177
        %s179 = sand.u32 %s66, 1
        %s180 = smul.addr %s179, 128
        %s181 = scalar_lea.vmem [#allocation5], %s180
        // Predicated region
        $region29: #{tpu_custom_call.1} parent=23 // pred_check
          %p182 = pneg %p76
        $region30: #{tpu_custom_call.1} parent=23 // pred_check_branch
          %184 = sbr.rel (%p182) target = $region32
        $region31: #{tpu_custom_call.1} parent=23 // pred_region
          #allocation7 [shape = 'u32[6]{0}', space=smem, size = 0x18, scoped, tag = 'DMA stride descriptor']
          %s185 = smul.u32 2, %s23
          %s186 = smul.u32 4, %s22
          %s188 = ssub.s32 2048, 2048
          %189 = vsyncadd %s178, %s188
          %s190 = smul.addr %s186, 2
          %s191 = smul.addr %s185, 16
          %s192 = sadd.s32 %s190, %s191
          %s193 = smul.addr %s192, 128
          %s194 = scalar_lea.hbm %s1, %s193
          %s196 = sshll.u32 1, 14
          %s197 = sxor.u32 4294967295, %s196
          %s200 = sshll.u32 7, 18
          %s201 = sxor.u32 4294967295, %s200
          %s202 = sand.u32 0, %s201
          %s204 = sor.u32 %s202, 0
          %s206 = sshll.u32 3, 24
          %s207 = sxor.u32 4294967295, %s206
          %s208 = sand.u32 %s204, %s207
          %s210 = sor.u32 %s208, 0
          %s211 = sshll.u32 %s181, 4
          %s212 = int_to_ptr.vmem [resolvable:$true] %s211
          %218 = sst [smem:[#allocation7]] 1024
          %s219 = scalar_lea.smem [#allocation7], 1
          %220 = sst [smem:[%s219]] 2048
          %s221 = scalar_lea.smem [#allocation7], 2
          %222 = sst [smem:[%s221]] 4
          %s223 = scalar_lea.smem [#allocation7], 3
          %224 = sst [smem:[%s223]] 256
          %s225 = scalar_lea.smem [#allocation7], 4
          %226 = sst [smem:[%s225]] 256
          %s227 = scalar_lea.smem [#allocation7], 5
          %228 = sst [smem:[%s227]] 16
          %230 = dma.general %s212, 2048, %s194, %s178, [#allocation6], [#allocation7], %s210, 0
        $region32: #{tpu_custom_call.1} parent=23 // pred_fallthru
          _
      $region24: #{tpu_custom_call.1} parent=5 // pred_fallthru
        _
      %p231 = scmp.le.s32.totalorder 2, %s13
      // Predicated region
      $region33: #{tpu_custom_call.1} parent=5 // pred_check
        %p232 = pneg %p231
      $region34: #{tpu_custom_call.1} parent=5 // pred_check_branch
        %234 = sbr.rel (%p232) target = $region36
      $region35: #{tpu_custom_call.1} parent=5 // pred_region
        %s235 = ssub.s32 %s13, 2
        // Predicated region
        $region37: #{tpu_custom_call.1} parent=35 // pred_check
          %p236 = pneg %p82
        $region38: #{tpu_custom_call.1} parent=35 // pred_check_branch
          %238 = sbr.rel (%p236) target = $region40
        $region39: #{tpu_custom_call.1} parent=35 // pred_region
          %s239 = sand.u32 %s67, 1
          %s240 = scalar_lea.sflag [#allocation4], %s239
          %s241 = sand.u32 %s67, 1
          %s242 = smul.addr %s241, 128
          %s243 = scalar_lea.vmem [#allocation5], %s242
          %244 = dma.done %s240, 2048
        $region40: #{tpu_custom_call.1} parent=35 // pred_fallthru
          _
      $region36: #{tpu_custom_call.1} parent=5 // pred_fallthru
        _
    $region6: #{tpu_custom_call.1} parent=1 // loop_footer
      %s17 = sadd.s32 1, %s13
    $region7: #{tpu_custom_call.1} parent=1 // loop_footer_branch
      %12 = sbr.rel target = $region3
    $region8: #{tpu_custom_call.1} parent=1 // loop_exit
      _
    %245 = vsyncpa [#allocation3], 1
    %s246 = scalar_lea.sflag [#allocation3], 1
    %247 = vsyncpa %s246, 1
    %248 = vsyncpa [#allocation4], 1
    %s249 = scalar_lea.sflag [#allocation4], 1
    %250 = vsyncpa %s249, 1

</llo_original>
